<compile_context>
chip_gen: v6e
topology: v6e:2x2x1
jax: 0.10.0
libtpu: 0.0.40
codegen_flags: <defaults>
</compile_context>

<pallas_src>
import functools

import jax
import jax.numpy as jnp
from jax import lax
from jax.experimental import pallas as pl
from jax.experimental.pallas import tpu as pltpu


def _conv_block_kernel(x_ref, w1_ref, s1_ref, b1_ref, w2_ref, s2_ref, b2_ref,
                       o_ref, *, H):
    """Fused ConvBNRelu -> ConvBNRelu for a tile of B images.

    x_ref : (B*H, W*C0)     bf16  fused-lane NHWC input rows (B images stacked)
    w1_ref: (3, W*C0, W*C1) bf16  layer-1 width-Toeplitz taps (one per dy)
    s1/b1 : (1, W*C1)       f32   folded conv-bias + BN scale/shift, tiled over W
    w2_ref: (3, W*C1, W*C1) bf16  layer-2 taps
    s2/b2 : (1, W*C1)       f32
    o_ref : (B*H, W*C1)     f32   lane-dense output rows
    """
    BH = x_ref.shape[0]
    WC1 = o_ref.shape[1]

    # Per-image row-boundary masks for the dy = 0 / 2 shifted contributions
    # (also kill the roll wrap-around rows, which land on these boundaries).
    row = lax.broadcasted_iota(jnp.int32, (BH, WC1), 0) % H
    top = row == 0          # rows whose "y-1" neighbour is outside the image
    bot = row == (H - 1)    # rows whose "y+1" neighbour is outside the image

    def conv_bn_relu(plane_bf16, w_ref, s_ref, b_ref):
        # Three lane-dense MXU matmuls on the SAME unshifted bf16 plane; the
        # dy row shift is applied to the f32 products via XLU rolls + masks:
        #   out[y] = sum_dy (plane @ w[dy])[y + dy - 1], zero outside the image.
        p0 = jnp.dot(plane_bf16, w_ref[0], preferred_element_type=jnp.float32)
        p1 = jnp.dot(plane_bf16, w_ref[1], preferred_element_type=jnp.float32)
        p2 = jnp.dot(plane_bf16, w_ref[2], preferred_element_type=jnp.float32)
        acc = (p1
               + jnp.where(top, 0.0, pltpu.roll(p0, shift=1, axis=0))
               # shift = BH - 1  ==  roll by -1 (bring row y+1 down to row y)
               + jnp.where(bot, 0.0, pltpu.roll(p2, shift=BH - 1, axis=0)))
        # Folded conv-bias + eval-mode BN affine + ReLU, kept in f32
        # (no bf16 VPU on v5e).
        return jnp.maximum(acc * s_ref[...] + b_ref[...], 0.0)

    y1 = conv_bn_relu(x_ref[...], w1_ref, s1_ref, b1_ref)              # (BH, WC1) f32
    y2 = conv_bn_relu(y1.astype(jnp.bfloat16), w2_ref, s2_ref, b2_ref)  # one cast/layer
    o_ref[...] = y2.astype(o_ref.dtype)


def _toeplitz_taps(w_oihw, W):
    """OIHW (Cout,Cin,3,3) -> (3, W*Cin, W*Cout) per-dy width-Toeplitz weights.

    T[dy][xin*Cin + ci, x*Cout + co] = w[co, ci, dy, dx] with xin = x + dx - 1;
    entries that would read outside [0, W) are absent -> width zero-padding.
    """
    Cout, Cin, KH, KW = w_oihw.shape
    taps = []
    for dy in range(KH):
        t = jnp.zeros((W * Cin, W * Cout), jnp.float32)
        for dx in range(KW):
            sel = jnp.eye(W, W, k=1 - dx, dtype=jnp.float32)  # sel[x+dx-1, x] = 1
            blk = w_oihw[:, :, dy, dx].astype(jnp.float32).T  # (Cin, Cout)
            t = t + jnp.kron(sel, blk)
        taps.append(t)
    return jnp.stack(taps).astype(jnp.bfloat16)


def _fold_bn(p, W, eps=1e-5):
    """Fold conv bias + eval-mode BN into per-output-lane scale/shift (1, W*Cout)."""
    scale = p["gamma"] / jnp.sqrt(p["rvar"] + eps)
    shift = p["beta"] + scale * (p["b"] - p["rmean"])
    cout = scale.shape[0]
    scale = jnp.tile(scale, W).reshape(1, W * cout).astype(jnp.float32)
    shift = jnp.tile(shift, W).reshape(1, W * cout).astype(jnp.float32)
    return scale, shift


def _pick_batch_tile(N, H, target_rows=256):
    """Images per grid step: largest divisor b of N with b*H <= target rows,
    preferring a sublane-friendly (multiple-of-8) row extent (or b == N)."""
    divs = [d for d in range(1, N + 1) if N % d == 0]
    ok = [d for d in divs
          if d * H <= max(target_rows, H) and ((d * H) % 8 == 0 or d == N)]
    if not ok:
        ok = [d for d in divs if (d * H) % 8 == 0 or d == N]
    return max(ok)


def conv_block_forward(x_nchw, params0, params1, eps=1e-5, target_rows=256):
    """ConvBlock(final=False): ConvBNRelu(C0->C1) -> ConvBNRelu(C1->C1)."""
    N, C0, H, W = x_nchw.shape
    C1 = params0["w"].shape[0]

    # Single entry-point layout change: NCHW -> NHWC with fused (W, C) lanes,
    # rows flattened to (N*H), cast to bf16 once (MXU LHS operand + half DMA).
    x = jnp.transpose(x_nchw, (0, 2, 3, 1)).reshape(N * H, W * C0)
    x = x.astype(jnp.bfloat16)

    w1 = _toeplitz_taps(params0["w"], W)          # (3, W*C0, W*C1) bf16
    w2 = _toeplitz_taps(params1["w"], W)          # (3, W*C1, W*C1) bf16
    s1, b1 = _fold_bn(params0, W, eps)
    s2, b2 = _fold_bn(params1, W, eps)

    B = _pick_batch_tile(N, H, target_rows)       # images per grid step
    BH = B * H
    grid = (N // B,)

    kernel = functools.partial(_conv_block_kernel, H=H)

    # FLOPs actually issued to the MXU (Toeplitz: ~W/3x the real conv FLOPs).
    flops = 2 * N * H * 3 * ((W * C0) * (W * C1) + (W * C1) * (W * C1))
    bytes_accessed = (N * H * W * C0 * 2            # bf16 input
                      + N * H * W * C1 * 4          # f32 output
                      + 3 * (W * C0) * (W * C1) * 2
                      + 3 * (W * C1) * (W * C1) * 2
                      + 4 * (W * C1) * 4)

    y = pl.pallas_call(
        kernel,
        out_shape=jax.ShapeDtypeStruct((N * H, W * C1), jnp.float32),
        grid=grid,
        in_specs=[
            pl.BlockSpec((BH, W * C0), lambda g: (g, 0)),
            pl.BlockSpec((3, W * C0, W * C1), lambda g: (0, 0, 0)),
            pl.BlockSpec((1, W * C1), lambda g: (0, 0)),
            pl.BlockSpec((1, W * C1), lambda g: (0, 0)),
            pl.BlockSpec((3, W * C1, W * C1), lambda g: (0, 0, 0)),
            pl.BlockSpec((1, W * C1), lambda g: (0, 0)),
            pl.BlockSpec((1, W * C1), lambda g: (0, 0)),
        ],
        out_specs=pl.BlockSpec((BH, W * C1), lambda g: (g, 0)),
        compiler_params=pltpu.CompilerParams(
            dimension_semantics=("parallel",),
            vmem_limit_bytes=32 * 1024 * 1024),
        cost_estimate=pl.CostEstimate(flops=flops, transcendentals=0,
                                      bytes_accessed=bytes_accessed),
    )(x, w1, s1, b1, w2, s2, b2)

    # (N*H, W*C1) is contiguous NHWC; un-fuse lanes, back to NCHW f32.
    return jnp.transpose(y.reshape(N, H, W, C1), (0, 3, 1, 2)).astype(x_nchw.dtype)


def init_conv_bn_params(key, cin, cout):
    """Deterministic kaiming_normal_(relu) conv weight, bias=0.01, default BN."""
    fan_in = cin * 3 * 3
    std = (2.0 / fan_in) ** 0.5
    w = std * jax.random.normal(key, (cout, cin, 3, 3), dtype=jnp.float32)
    b = jnp.full((cout,), 0.01, dtype=jnp.float32)
    gamma = jnp.ones((cout,), jnp.float32)
    beta = jnp.zeros((cout,), jnp.float32)
    rmean = jnp.zeros((cout,), jnp.float32)
    rvar = jnp.ones((cout,), jnp.float32)
    return dict(w=w, b=b, gamma=gamma, beta=beta, rmean=rmean, rvar=rvar)


# ---------------------------------------------------------------------------
# Pure-JAX references (lax.conv) for correctness checks.
# ---------------------------------------------------------------------------
def _ref_conv_bn_relu(x_nchw, p, eps=1e-5, matmul_dtype=jnp.float32):
    y = lax.conv_general_dilated(
        x_nchw.astype(matmul_dtype), p["w"].astype(matmul_dtype),
        window_strides=(1, 1), padding=((1, 1), (1, 1)),
        dimension_numbers=("NCHW", "OIHW", "NCHW"),
        preferred_element_type=jnp.float32)
    y = y + p["b"][None, :, None, None]
    y = (p["gamma"][None, :, None, None]
         * (y - p["rmean"][None, :, None, None])
         / jnp.sqrt(p["rvar"] + eps)[None, :, None, None]
         + p["beta"][None, :, None, None])
    return jnp.maximum(y, 0.0)


def _ref_conv_block(x_nchw, p0, p1, matmul_dtype=jnp.float32):
    y = _ref_conv_bn_relu(x_nchw, p0, matmul_dtype=matmul_dtype)
    return _ref_conv_bn_relu(y, p1, matmul_dtype=matmul_dtype)


if __name__ == "__main__":
    key = jax.random.PRNGKey(0)
    k_x, k_w0, k_w1 = jax.random.split(key, 3)

    # channel = [4, 8]  ->  ConvBlock([4, 8], final=False)
    N, C0, C1, H, W = 2, 4, 8, 16, 16
    x = jax.random.normal(k_x, (N, C0, H, W), dtype=jnp.float32)

    params0 = init_conv_bn_params(k_w0, C0, C1)   # conv_block0: C0 -> C1
    params1 = init_conv_bn_params(k_w1, C1, C1)   # conv_block1: C1 -> C1

    out = jax.block_until_ready(conv_block_forward(x, params0, params1))
    assert out.shape == (N, C1, H, W), out.shape

    # Tight check vs. a reference using the same bf16 MXU operands / f32 accum.
    ref_bf16 = jax.block_until_ready(
        _ref_conv_block(x, params0, params1, matmul_dtype=jnp.bfloat16))
    err_bf16 = float(jnp.max(jnp.abs(out - ref_bf16)))
    assert jnp.allclose(out, ref_bf16, atol=3e-3, rtol=3e-3), err_bf16

    # Loose check vs. the full-f32 reference (kernel uses bf16 MXU operands).
    ref_f32 = jax.block_until_ready(
        _ref_conv_block(x, params0, params1, matmul_dtype=jnp.float32))
    err_f32 = float(jnp.max(jnp.abs(out - ref_f32)))
    assert jnp.allclose(out, ref_f32, atol=5e-2, rtol=5e-2), err_f32

    print("KERNEL_OK")
</pallas_src>

<mosaic_0001>
module attributes {stable_mosaic.version = 11 : i64} {
  func.func @_conv_block_kernel(%arg0: i32, %arg1: memref<32x64xbf16, #tpu.memory_space<vmem>>, %arg2: memref<3x64x128xbf16, #tpu.memory_space<vmem>>, %arg3: memref<1x128xf32, #tpu.memory_space<vmem>>, %arg4: memref<1x128xf32, #tpu.memory_space<vmem>>, %arg5: memref<3x128x128xbf16, #tpu.memory_space<vmem>>, %arg6: memref<1x128xf32, #tpu.memory_space<vmem>>, %arg7: memref<1x128xf32, #tpu.memory_space<vmem>>, %arg8: memref<32x128xf32, #tpu.memory_space<vmem>>) attributes {dimension_semantics = [#tpu.dimension_semantics<parallel>], iteration_bounds = array<i64: 1>, scalar_prefetch = 0 : i64, scratch_operands = 0 : i64, tpu.core_type = #tpu.core_type<tc>, window_params = [{transform_indices = @transform_0, window_bounds = array<i64: 32, 64>}, {pipeline_mode = #tpu.pipeline_mode<synchronous>, transform_indices = @transform_1, window_bounds = array<i64: 3, 64, 128>}, {pipeline_mode = #tpu.pipeline_mode<synchronous>, transform_indices = @transform_2, window_bounds = array<i64: 1, 128>}, {pipeline_mode = #tpu.pipeline_mode<synchronous>, transform_indices = @transform_3, window_bounds = array<i64: 1, 128>}, {pipeline_mode = #tpu.pipeline_mode<synchronous>, transform_indices = @transform_4, window_bounds = array<i64: 3, 128, 128>}, {pipeline_mode = #tpu.pipeline_mode<synchronous>, transform_indices = @transform_5, window_bounds = array<i64: 1, 128>}, {pipeline_mode = #tpu.pipeline_mode<synchronous>, transform_indices = @transform_6, window_bounds = array<i64: 1, 128>}, {transform_indices = @transform_7, window_bounds = array<i64: 32, 128>}]} {
    %0 = tpu.iota {dimensions = array<i32: 0>} : vector<32x128xi32>
    %c16_i32 = arith.constant 16 : i32
    %c0_i32 = arith.constant 0 : i32
    %1 = arith.cmpi eq, %c16_i32, %c0_i32 : i32
    %c1_i32 = arith.constant 1 : i32
    %2 = arith.select %1, %c1_i32, %c16_i32 : i32
    %3 = vector.broadcast %2 : i32 to vector<32x128xi32>
    %4 = arith.remsi %0, %3 : vector<32x128xi32>
    %c0_i32_0 = arith.constant 0 : i32
    %5 = vector.broadcast %c0_i32_0 : i32 to vector<32x128xi32>
    %6 = arith.cmpi ne, %4, %5 : vector<32x128xi32>
    %c0_i32_1 = arith.constant 0 : i32
    %7 = vector.broadcast %c0_i32_1 : i32 to vector<32x128xi32>
    %8 = arith.cmpi slt, %4, %7 : vector<32x128xi32>
    %c0_i32_2 = arith.constant 0 : i32
    %9 = arith.cmpi slt, %2, %c0_i32_2 : i32
    %10 = vector.broadcast %9 : i1 to vector<32x128xi1>
    %11 = vector.broadcast %10 : vector<32x128xi1> to vector<32x128xi1>
    %12 = arith.xori %8, %11 : vector<32x128xi1>
    %13 = arith.andi %12, %6 : vector<32x128xi1>
    %14 = vector.broadcast %2 : i32 to vector<32x128xi32>
    %15 = arith.addi %4, %14 : vector<32x128xi32>
    %16 = arith.select %13, %15, %4 : vector<32x128xi1>, vector<32x128xi32>
    %c0_i32_3 = arith.constant 0 : i32
    %17 = vector.broadcast %c0_i32_3 : i32 to vector<32x128xi32>
    %18 = arith.cmpi eq, %16, %17 : vector<32x128xi32>
    %c15_i32 = arith.constant 15 : i32
    %19 = vector.broadcast %c15_i32 : i32 to vector<32x128xi32>
    %20 = arith.cmpi eq, %16, %19 : vector<32x128xi32>
    %c0 = arith.constant 0 : index
    %c0_4 = arith.constant 0 : index
    %21 = vector.load %arg1[%c0, %c0_4] : memref<32x64xbf16, #tpu.memory_space<vmem>>, vector<32x64xbf16>
    %c0_5 = arith.constant 0 : index
    %c0_6 = arith.constant 0 : index
    %c0_7 = arith.constant 0 : index
    %22 = vector.load %arg2[%c0_5, %c0_6, %c0_7] : memref<3x64x128xbf16, #tpu.memory_space<vmem>>, vector<1x64x128xbf16>
    %23 = vector.shape_cast %22 : vector<1x64x128xbf16> to vector<64x128xbf16>
    %cst = arith.constant dense<0.000000e+00> : vector<32x128xf32>
    %24 = tpu.matmul %21, %23, %cst {dimension_numbers = #tpu.dot_dimension_numbers<[1], [0], [0], [1], [0, 0, 1, 1], [], []>} : vector<32x64xbf16>, vector<64x128xbf16>, vector<32x128xf32> -> vector<32x128xf32>
    %c1 = arith.constant 1 : index
    %c0_8 = arith.constant 0 : index
    %c0_9 = arith.constant 0 : index
    %25 = vector.load %arg2[%c1, %c0_8, %c0_9] : memref<3x64x128xbf16, #tpu.memory_space<vmem>>, vector<1x64x128xbf16>
    %26 = vector.shape_cast %25 : vector<1x64x128xbf16> to vector<64x128xbf16>
    %cst_10 = arith.constant dense<0.000000e+00> : vector<32x128xf32>
    %27 = tpu.matmul %21, %26, %cst_10 {dimension_numbers = #tpu.dot_dimension_numbers<[1], [0], [0], [1], [0, 0, 1, 1], [], []>} : vector<32x64xbf16>, vector<64x128xbf16>, vector<32x128xf32> -> vector<32x128xf32>
    %c2 = arith.constant 2 : index
    %c0_11 = arith.constant 0 : index
    %c0_12 = arith.constant 0 : index
    %28 = vector.load %arg2[%c2, %c0_11, %c0_12] : memref<3x64x128xbf16, #tpu.memory_space<vmem>>, vector<1x64x128xbf16>
    %29 = vector.shape_cast %28 : vector<1x64x128xbf16> to vector<64x128xbf16>
    %cst_13 = arith.constant dense<0.000000e+00> : vector<32x128xf32>
    %30 = tpu.matmul %21, %29, %cst_13 {dimension_numbers = #tpu.dot_dimension_numbers<[1], [0], [0], [1], [0, 0, 1, 1], [], []>} : vector<32x64xbf16>, vector<64x128xbf16>, vector<32x128xf32> -> vector<32x128xf32>
    %c1_i32_14 = arith.constant 1 : i32
    %31 = tpu.dynamic_rotate %24 by %c1_i32_14 dim 0 : vector<32x128xf32>, i32 -> vector<32x128xf32>
    %cst_15 = arith.constant 0.000000e+00 : f32
    %32 = vector.broadcast %cst_15 : f32 to vector<32x128xf32>
    %33 = arith.select %18, %32, %31 : vector<32x128xi1>, vector<32x128xf32>
    %34 = arith.addf %27, %33 : vector<32x128xf32>
    %c31_i32 = arith.constant 31 : i32
    %35 = tpu.dynamic_rotate %30 by %c31_i32 dim 0 : vector<32x128xf32>, i32 -> vector<32x128xf32>
    %cst_16 = arith.constant 0.000000e+00 : f32
    %36 = vector.broadcast %cst_16 : f32 to vector<32x128xf32>
    %37 = arith.select %20, %36, %35 : vector<32x128xi1>, vector<32x128xf32>
    %38 = arith.addf %34, %37 : vector<32x128xf32>
    %c0_17 = arith.constant 0 : index
    %c0_18 = arith.constant 0 : index
    %39 = vector.load %arg3[%c0_17, %c0_18] : memref<1x128xf32, #tpu.memory_space<vmem>>, vector<1x128xf32>
    %40 = vector.broadcast %39 : vector<1x128xf32> to vector<32x128xf32>
    %41 = arith.mulf %38, %40 : vector<32x128xf32>
    %c0_19 = arith.constant 0 : index
    %c0_20 = arith.constant 0 : index
    %42 = vector.load %arg4[%c0_19, %c0_20] : memref<1x128xf32, #tpu.memory_space<vmem>>, vector<1x128xf32>
    %43 = vector.broadcast %42 : vector<1x128xf32> to vector<32x128xf32>
    %44 = arith.addf %41, %43 : vector<32x128xf32>
    %cst_21 = arith.constant 0.000000e+00 : f32
    %45 = vector.broadcast %cst_21 : f32 to vector<32x128xf32>
    %46 = arith.maximumf %44, %45 : vector<32x128xf32>
    %47 = arith.truncf %46 : vector<32x128xf32> to vector<32x128xbf16>
    %c0_22 = arith.constant 0 : index
    %c0_23 = arith.constant 0 : index
    %c0_24 = arith.constant 0 : index
    %48 = vector.load %arg5[%c0_22, %c0_23, %c0_24] : memref<3x128x128xbf16, #tpu.memory_space<vmem>>, vector<1x128x128xbf16>
    %49 = vector.shape_cast %48 : vector<1x128x128xbf16> to vector<128x128xbf16>
    %cst_25 = arith.constant dense<0.000000e+00> : vector<32x128xf32>
    %50 = tpu.matmul %47, %49, %cst_25 {dimension_numbers = #tpu.dot_dimension_numbers<[1], [0], [0], [1], [0, 0, 1, 1], [], []>} : vector<32x128xbf16>, vector<128x128xbf16>, vector<32x128xf32> -> vector<32x128xf32>
    %c1_26 = arith.constant 1 : index
    %c0_27 = arith.constant 0 : index
    %c0_28 = arith.constant 0 : index
    %51 = vector.load %arg5[%c1_26, %c0_27, %c0_28] : memref<3x128x128xbf16, #tpu.memory_space<vmem>>, vector<1x128x128xbf16>
    %52 = vector.shape_cast %51 : vector<1x128x128xbf16> to vector<128x128xbf16>
    %cst_29 = arith.constant dense<0.000000e+00> : vector<32x128xf32>
    %53 = tpu.matmul %47, %52, %cst_29 {dimension_numbers = #tpu.dot_dimension_numbers<[1], [0], [0], [1], [0, 0, 1, 1], [], []>} : vector<32x128xbf16>, vector<128x128xbf16>, vector<32x128xf32> -> vector<32x128xf32>
    %c2_30 = arith.constant 2 : index
    %c0_31 = arith.constant 0 : index
    %c0_32 = arith.constant 0 : index
    %54 = vector.load %arg5[%c2_30, %c0_31, %c0_32] : memref<3x128x128xbf16, #tpu.memory_space<vmem>>, vector<1x128x128xbf16>
    %55 = vector.shape_cast %54 : vector<1x128x128xbf16> to vector<128x128xbf16>
    %cst_33 = arith.constant dense<0.000000e+00> : vector<32x128xf32>
    %56 = tpu.matmul %47, %55, %cst_33 {dimension_numbers = #tpu.dot_dimension_numbers<[1], [0], [0], [1], [0, 0, 1, 1], [], []>} : vector<32x128xbf16>, vector<128x128xbf16>, vector<32x128xf32> -> vector<32x128xf32>
    %c1_i32_34 = arith.constant 1 : i32
    %57 = tpu.dynamic_rotate %50 by %c1_i32_34 dim 0 : vector<32x128xf32>, i32 -> vector<32x128xf32>
    %cst_35 = arith.constant 0.000000e+00 : f32
    %58 = vector.broadcast %cst_35 : f32 to vector<32x128xf32>
    %59 = arith.select %18, %58, %57 : vector<32x128xi1>, vector<32x128xf32>
    %60 = arith.addf %53, %59 : vector<32x128xf32>
    %c31_i32_36 = arith.constant 31 : i32
    %61 = tpu.dynamic_rotate %56 by %c31_i32_36 dim 0 : vector<32x128xf32>, i32 -> vector<32x128xf32>
    %cst_37 = arith.constant 0.000000e+00 : f32
    %62 = vector.broadcast %cst_37 : f32 to vector<32x128xf32>
    %63 = arith.select %20, %62, %61 : vector<32x128xi1>, vector<32x128xf32>
    %64 = arith.addf %60, %63 : vector<32x128xf32>
    %c0_38 = arith.constant 0 : index
    %c0_39 = arith.constant 0 : index
    %65 = vector.load %arg6[%c0_38, %c0_39] : memref<1x128xf32, #tpu.memory_space<vmem>>, vector<1x128xf32>
    %66 = vector.broadcast %65 : vector<1x128xf32> to vector<32x128xf32>
    %67 = arith.mulf %64, %66 : vector<32x128xf32>
    %c0_40 = arith.constant 0 : index
    %c0_41 = arith.constant 0 : index
    %68 = vector.load %arg7[%c0_40, %c0_41] : memref<1x128xf32, #tpu.memory_space<vmem>>, vector<1x128xf32>
    %69 = vector.broadcast %68 : vector<1x128xf32> to vector<32x128xf32>
    %70 = arith.addf %67, %69 : vector<32x128xf32>
    %cst_42 = arith.constant 0.000000e+00 : f32
    %71 = vector.broadcast %cst_42 : f32 to vector<32x128xf32>
    %72 = arith.maximumf %70, %71 : vector<32x128xf32>
    %c0_43 = arith.constant 0 : index
    %c0_44 = arith.constant 0 : index
    %73 = vector.load %arg8[%c0_43, %c0_44] : memref<32x128xf32, #tpu.memory_space<vmem>>, vector<32x128xf32>
    tpu.vector_store %arg8[%c0_43, %c0_44], %72 {strides = array<i32>} : memref<32x128xf32, #tpu.memory_space<vmem>>, vector<32x128xf32>,
    return
  }
  func.func @transform_0(%arg0: i32) -> (i32, i32) {
    %c0_i32 = arith.constant 0 : i32
    %c0_i32_0 = arith.constant 0 : i32
    return %arg0, %c0_i32 : i32, i32
  }
  func.func @transform_1(%arg0: i32) -> (i32, i32, i32) {
    %c0_i32 = arith.constant 0 : i32
    %c0_i32_0 = arith.constant 0 : i32
    %c0_i32_1 = arith.constant 0 : i32
    %c0_i32_2 = arith.constant 0 : i32
    return %c0_i32, %c0_i32_0, %c0_i32_1 : i32, i32, i32
  }
  func.func @transform_2(%arg0: i32) -> (i32, i32) {
    %c0_i32 = arith.constant 0 : i32
    %c0_i32_0 = arith.constant 0 : i32
    %c0_i32_1 = arith.constant 0 : i32
    return %c0_i32, %c0_i32_0 : i32, i32
  }
  func.func @transform_3(%arg0: i32) -> (i32, i32) {
    %c0_i32 = arith.constant 0 : i32
    %c0_i32_0 = arith.constant 0 : i32
    %c0_i32_1 = arith.constant 0 : i32
    return %c0_i32, %c0_i32_0 : i32, i32
  }
  func.func @transform_4(%arg0: i32) -> (i32, i32, i32) {
    %c0_i32 = arith.constant 0 : i32
    %c0_i32_0 = arith.constant 0 : i32
    %c0_i32_1 = arith.constant 0 : i32
    %c0_i32_2 = arith.constant 0 : i32
    return %c0_i32, %c0_i32_0, %c0_i32_1 : i32, i32, i32
  }
  func.func @transform_5(%arg0: i32) -> (i32, i32) {
    %c0_i32 = arith.constant 0 : i32
    %c0_i32_0 = arith.constant 0 : i32
    %c0_i32_1 = arith.constant 0 : i32
    return %c0_i32, %c0_i32_0 : i32, i32
  }
  func.func @transform_6(%arg0: i32) -> (i32, i32) {
    %c0_i32 = arith.constant 0 : i32
    %c0_i32_0 = arith.constant 0 : i32
    %c0_i32_1 = arith.constant 0 : i32
    return %c0_i32, %c0_i32_0 : i32, i32
  }
  func.func @transform_7(%arg0: i32) -> (i32, i32) {
    %c0_i32 = arith.constant 0 : i32
    %c0_i32_0 = arith.constant 0 : i32
    return %arg0, %c0_i32 : i32, i32
  }
}

</mosaic_0001>

<llo_original>
// kernel: tpu_custom_call.1
$region0: #{tpu_custom_call.1}
  #allocation0 [shape = 'u32[]', space=smem, size = 0x4, offset = 0x4, fixed_abs, tag = 'smem constant byte address 0x4 - core index']
  #allocation1 [shape = 'u32[144,128]{1,0:T(1,128)}', space=vmem, size = 0x12000, scoped, tag = 'internal scratch']
  %s0 = inlined_call_operand.hbm [shape: bf16[32,64], index: 0, kind: input, shape index: {}]
  %s1 = inlined_call_operand.hbm [shape: bf16[3,64,128], index: 1, kind: input, shape index: {}]
  %s2 = inlined_call_operand.vmem [shape: f32[1,128], index: 2, kind: input, shape index: {}]
  %s3 = inlined_call_operand.vmem [shape: f32[1,128], index: 3, kind: input, shape index: {}]
  %s4 = inlined_call_operand.hbm [shape: bf16[3,128,128], index: 4, kind: input, shape index: {}]
  %s5 = inlined_call_operand.vmem [shape: f32[1,128], index: 5, kind: input, shape index: {}]
  %s6 = inlined_call_operand.vmem [shape: f32[1,128], index: 6, kind: input, shape index: {}]
  %s7 = inlined_call_operand.hbm [shape: f32[32,128], index: 7, kind: output, shape index: {}]
  %s8 = sld [smem:[#allocation0]]
  $region50: #{tpu_custom_call.1} parent=0
    _
  %s10 = ssub.s32 1, %s8
  %s11 = scalar_select 0, %s10, %s8
  $region1: #{tpu_custom_call.1} parent=0
    #allocation2 [shape = 'u8[8192]{0}', space=vmem, size = 0x2000, scoped, tag = 'input window, operand 0, single buffered']
    #allocation3 [shape = 's32[1]{0}', space=sflag, size = 0x4, scoped, tag = 'scoped memory for tpu_custom_call.1']
    #allocation4 [shape = 's32[1]{0}', space=sflag, size = 0x4, scoped, tag = 'scoped memory for tpu_custom_call.1']
    #allocation5 [shape = 'u8[49152]{0}', space=vmem, size = 0xc000, scoped, tag = 'input window, operand 1, single buffered']
    #allocation6 [shape = 's32[1]{0}', space=sflag, size = 0x4, scoped, tag = 'scoped memory for tpu_custom_call.1']
    #allocation7 [shape = 'u8[98304]{0}', space=vmem, size = 0x18000, scoped, tag = 'input window, operand 4, single buffered']
    #allocation8 [shape = 'u8[16384]{0}', space=vmem, size = 0x4000, scoped, tag = 'output window, operand 0, single buffered']
    %12 = vsyncpa [#allocation3], 0
    %13 = vsyncpa [#allocation6], 0
    %14 = vsyncpa [#allocation4], 0
    // Predicated region
    $region2: #{tpu_custom_call.1} parent=1 // pred_check
      _
    $region3: #{tpu_custom_call.1} parent=1 // pred_check_branch
      %16 = sbr.rel (0) target = $region5
    $region4: #{tpu_custom_call.1} parent=1 // pred_region
      %s18 = ssub.s32 256, 256
      %19 = vsyncadd [#allocation3], %s18
      %s20 = sshll.u32 [#allocation2], 4
      %s21 = int_to_ptr.vmem [resolvable:$true] %s20
      %26 = dma.hbm_to_vmem [thread:$0]  %s0, 256, %s21, [#allocation3], 64, 64, 4
    $region5: #{tpu_custom_call.1} parent=1 // pred_fallthru
      _
    // Predicated region
    $region6: #{tpu_custom_call.1} parent=1 // pred_check
      _
    $region7: #{tpu_custom_call.1} parent=1 // pred_check_branch
      %28 = sbr.rel (0) target = $region9
    $region8: #{tpu_custom_call.1} parent=1 // pred_region
      %s30 = ssub.s32 1536, 1536
      %31 = vsyncadd [#allocation6], %s30
      %s32 = sshll.u32 [#allocation5], 4
      %s33 = int_to_ptr.vmem [resolvable:$true] %s32
      %38 = dma.hbm_to_vmem [thread:$0]  %s1, 1536, %s33, [#allocation6], 64, 64, 4
    $region9: #{tpu_custom_call.1} parent=1 // pred_fallthru
      _
    // Predicated region
    $region10: #{tpu_custom_call.1} parent=1 // pred_check
      _
    $region11: #{tpu_custom_call.1} parent=1 // pred_check_branch
      %40 = sbr.rel (0) target = $region13
    $region12: #{tpu_custom_call.1} parent=1 // pred_region
      _
    $region13: #{tpu_custom_call.1} parent=1 // pred_fallthru
      _
    // Predicated region
    $region14: #{tpu_custom_call.1} parent=1 // pred_check
      _
    $region15: #{tpu_custom_call.1} parent=1 // pred_check_branch
      %42 = sbr.rel (0) target = $region17
    $region16: #{tpu_custom_call.1} parent=1 // pred_region
      _
    $region17: #{tpu_custom_call.1} parent=1 // pred_fallthru
      _
    // Predicated region
    $region18: #{tpu_custom_call.1} parent=1 // pred_check
      _
    $region19: #{tpu_custom_call.1} parent=1 // pred_check_branch
      %44 = sbr.rel (0) target = $region21
    $region20: #{tpu_custom_call.1} parent=1 // pred_region
      %s46 = ssub.s32 3072, 3072
      %47 = vsyncadd [#allocation6], %s46
      %s48 = sshll.u32 [#allocation7], 4
      %s49 = int_to_ptr.vmem [resolvable:$true] %s48
      %54 = dma.hbm_to_vmem [thread:$0]  %s4, 3072, %s49, [#allocation6], 64, 64, 4
    $region21: #{tpu_custom_call.1} parent=1 // pred_fallthru
      _
    // Predicated region
    $region22: #{tpu_custom_call.1} parent=1 // pred_check
      _
    $region23: #{tpu_custom_call.1} parent=1 // pred_check_branch
      %56 = sbr.rel (0) target = $region25
    $region24: #{tpu_custom_call.1} parent=1 // pred_region
      _
    $region25: #{tpu_custom_call.1} parent=1 // pred_fallthru
      _
    // Predicated region
    $region26: #{tpu_custom_call.1} parent=1 // pred_check
      _
    $region27: #{tpu_custom_call.1} parent=1 // pred_check_branch
      %58 = sbr.rel (0) target = $region29
    $region28: #{tpu_custom_call.1} parent=1 // pred_region
      _
    $region29: #{tpu_custom_call.1} parent=1 // pred_fallthru
      _
    // Predicated region
    $region30: #{tpu_custom_call.1} parent=1 // pred_check
      _
    $region31: #{tpu_custom_call.1} parent=1 // pred_check_branch
      %60 = sbr.rel (0) target = $region33
    $region32: #{tpu_custom_call.1} parent=1 // pred_region
      %61 = dma.done [#allocation3], 256
    $region33: #{tpu_custom_call.1} parent=1 // pred_fallthru
      _
    // Predicated region
    $region34: #{tpu_custom_call.1} parent=1 // pred_check
      _
    $region35: #{tpu_custom_call.1} parent=1 // pred_check_branch
      %63 = sbr.rel (0) target = $region37
    $region36: #{tpu_custom_call.1} parent=1 // pred_region
      %64 = dma.done [#allocation6], 1536
    $region37: #{tpu_custom_call.1} parent=1 // pred_fallthru
      _
    // Predicated region
    $region38: #{tpu_custom_call.1} parent=1 // pred_check
      _
    $region39: #{tpu_custom_call.1} parent=1 // pred_check_branch
      %66 = sbr.rel (0) target = $region41
    $region40: #{tpu_custom_call.1} parent=1 // pred_region
      %67 = dma.done [#allocation6], 3072
    $region41: #{tpu_custom_call.1} parent=1 // pred_fallthru
      _
    %v69 = vlaneseq
    %v70 = vshrl.u32 %v69, 7
    %v71 = vadd.s32 %v70, 8
    %v72 = vadd.s32 %v70, 16
    %v73 = vadd.s32 %v70, 24
    %vm74 = vcmp.lt.s32.totalorder %v70, 0
    %v75 = vsub.s32 0, %v70
    %v76 = vsel %vm74, %v75, %v70
    %v77 = vshrl.u32 %v76, 4
    %v78 = vand.u32 %v76, 15
    %v79 = vsub.s32 0, %v78
    %v80 = vsel %vm74, %v79, %v78
    %vm81 = vcmp.lt.s32.totalorder %v71, 0
    %v82 = vsub.s32 0, %v71
    %v83 = vsel %vm81, %v82, %v71
    %v84 = vshrl.u32 %v83, 4
    %v85 = vand.u32 %v83, 15
    %v86 = vsub.s32 0, %v85
    %v87 = vsel %vm81, %v86, %v85
    %vm88 = vcmp.lt.s32.totalorder %v72, 0
    %v89 = vsub.s32 0, %v72
    %v90 = vsel %vm88, %v89, %v72
    %v91 = vshrl.u32 %v90, 4
    %v92 = vand.u32 %v90, 15
    %v93 = vsub.s32 0, %v92
    %v94 = vsel %vm88, %v93, %v92
    %vm95 = vcmp.lt.s32.totalorder %v73, 0
    %v96 = vsub.s32 0, %v73
    %v97 = vsel %vm95, %v96, %v73
    %v98 = vshrl.u32 %v97, 4
    %v99 = vand.u32 %v97, 15
    %v100 = vsub.s32 0, %v99
    %v101 = vsel %vm95, %v100, %v99
    %vm102 = vcmp.ne.s32.totalorder %v80, 0
    %vm103 = vcmp.ne.s32.totalorder %v87, 0
    %vm104 = vcmp.ne.s32.totalorder %v94, 0
    %vm105 = vcmp.ne.s32.totalorder %v101, 0
    %vm106 = vcmp.lt.s32.totalorder %v80, 0
    %vm107 = vcmp.lt.s32.totalorder %v87, 0
    %vm108 = vcmp.lt.s32.totalorder %v94, 0
    %vm109 = vcmp.lt.s32.totalorder %v101, 0
    %vm110 = vmand %vm106, %vm102
    %vm111 = vmand %vm107, %vm103
    %vm112 = vmand %vm108, %vm104
    %vm113 = vmand %vm109, %vm105
    %v114 = vadd.s32 %v80, 16
    %v115 = vadd.s32 %v87, 16
    %v116 = vadd.s32 %v94, 16
    %v117 = vadd.s32 %v101, 16
    %v118 = vsel %vm110, %v114, %v80
    %v119 = vsel %vm111, %v115, %v87
    %v120 = vsel %vm112, %v116, %v94
    %v121 = vsel %vm113, %v117, %v101
    %vm122 = vcmp.eq.s32.totalorder %v118, 0
    %vm123 = vcmp.eq.s32.totalorder %v119, 0
    %vm124 = vcmp.eq.s32.totalorder %v120, 0
    %vm125 = vcmp.eq.s32.totalorder %v121, 0
    %vm126 = vcmp.eq.s32.totalorder %v118, 15
    %vm127 = vcmp.eq.s32.totalorder %v119, 15
    %vm128 = vcmp.eq.s32.totalorder %v120, 15
    %vm129 = vcmp.eq.s32.totalorder %v121, 15
    %v130 = vld [vmem:[#allocation2] sm:$0xf]
    %v131 = vld [vmem:[#allocation2 + $0x4] sm:$0xf]
    %v132 = vld [vmem:[#allocation2 + $0x8] sm:$0xf]
    %v133 = vld [vmem:[#allocation2 + $0xc] sm:$0xf]
    %v134 = vld [vmem:[#allocation5] sm:$0xf]
    %v135 = vld [vmem:[#allocation5 + $0x4] sm:$0xf]
    %v136 = vld [vmem:[#allocation5 + $0x8] sm:$0xf]
    %v137 = vld [vmem:[#allocation5 + $0xc] sm:$0xf]
    %v138 = vld [vmem:[#allocation5 + $0x10] sm:$0xf]
    %v139 = vld [vmem:[#allocation5 + $0x14] sm:$0xf]
    %v140 = vld [vmem:[#allocation5 + $0x18] sm:$0xf]
    %v141 = vld [vmem:[#allocation5 + $0x1c] sm:$0xf]
    %v146 = vunpack.c.l.b16 %v130
    %v147 = vunpack.c.l.b16 %v131
    %v148 = vunpack.c.l.b16 %v132
    %v149 = vunpack.c.l.b16 %v133
    %v150 = vpack.c.b16 %v147, %v146
    %v151 = vpack.c.b16 %v149, %v148
    %v160 = vunpack.c.l.b16 %v134
    %v161 = vunpack.c.l.b16 %v135
    %v162 = vunpack.c.l.b16 %v136
    %v163 = vunpack.c.l.b16 %v137
    %v164 = vunpack.c.l.b16 %v138
    %v165 = vunpack.c.l.b16 %v139
    %v166 = vunpack.c.l.b16 %v140
    %v167 = vunpack.c.l.b16 %v141
    %v168 = vpack.c.b16 %v161, %v160
    %v169 = vpack.c.b16 %v163, %v162
    %v170 = vpack.c.b16 %v165, %v164
    %v171 = vpack.c.b16 %v167, %v166
    %vm176 = vcmask 523264
    %v178 = vsel %vm176, %v150, 0
    %v181 = vsel %vm176, %v151, 0
    %183 = vmatprep.subr.bf16.mxu0 0
    %184 = vmatpush1.bf16.msra.mxu0 0
    %185 = vmatprep.subr.bf16.mxu0 0
    %186 = vmatpush1.bf16.msra.mxu0 0
    %187 = vmatprep.subr.bf16.mxu0 0
    %188 = vmatpush1.bf16.msra.mxu0 0
    %189 = vmatprep.subr.bf16.mxu0 0
    %190 = vmatpush1.bf16.msra.mxu0 0
    %191 = vmatprep.subr.bf16.mxu0 0
    %192 = vmatpush1.bf16.msra.mxu0 %v171
    %193 = vmatprep.subr.bf16.mxu0 0
    %194 = vmatpush1.bf16.msra.mxu0 %v170
    %195 = vmatprep.subr.bf16.mxu0 0
    %196 = vmatpush1.bf16.msra.mxu0 %v169
    %197 = vmatprep.subr.bf16.mxu0 0
    %198 = vmatpush1.bf16.msra.mxu0 %v168
    %199 = vmatprep.subr.bf16.mxu0 0
    %200 = vmatpush2.bf16.msra.mxu0 0
    %201 = vmatprep.subr.bf16.mxu0 0
    %202 = vmatpush2.bf16.msra.mxu0 0
    %203 = vmatprep.subr.bf16.mxu0 0
    %204 = vmatpush2.bf16.msra.mxu0 0
    %205 = vmatprep.subr.bf16.mxu0 0
    %206 = vmatpush2.bf16.msra.mxu0 0
    %207 = vmatprep.subr.bf16.mxu0 0
    %208 = vmatpush2.bf16.msra.mxu0 0
    %209 = vmatprep.subr.bf16.mxu0 0
    %210 = vmatpush2.bf16.msra.mxu0 0
    %211 = vmatprep.subr.bf16.mxu0 0
    %212 = vmatpush2.bf16.msra.mxu0 0
    %213 = vmatprep.subr.bf16.mxu0 0
    %214 = vmatpush2.bf16.msra.mxu0 0
    %215 = vmatprep.mubr.bf16.mxu0 0
    %216 = vmatmul.mubr.bf16.gmra.mxu0 %v178
    %v217 = vpop.f32.mrf.mxu0
    %v218 = vadd.f32 0.0, %v217
    %v219 = vpop.f32.mrf.mxu0
    %v220 = vpop.f32.mrf.mxu0
    %v221 = vadd.f32 0.0, %v220
    %v222 = vpop.f32.mrf.mxu0
    %223 = vmatprep.mubr.bf16.mxu0 0
    %224 = vmatmul.mubr.bf16.gmra.mxu0 %v181
    %v225 = vpop.f32.mrf.mxu0
    %v226 = vadd.f32 0.0, %v225
    %v227 = vpop.f32.mrf.mxu0
    %v228 = vpop.f32.mrf.mxu0
    %v229 = vadd.f32 0.0, %v228
    %v230 = vpop.f32.mrf.mxu0
    %231 = vdwg.mxu0
    %s232 = scalar_lea.vmem [#allocation5], 32
    %v233 = vld [vmem:[%s232] sm:$0xf]
    %v234 = vld [vmem:[%s232 + $0x4] sm:$0xf]
    %v235 = vld [vmem:[%s232 + $0x8] sm:$0xf]
    %v236 = vld [vmem:[%s232 + $0xc] sm:$0xf]
    %v237 = vld [vmem:[%s232 + $0x10] sm:$0xf]
    %v238 = vld [vmem:[%s232 + $0x14] sm:$0xf]
    %v239 = vld [vmem:[%s232 + $0x18] sm:$0xf]
    %v240 = vld [vmem:[%s232 + $0x1c] sm:$0xf]
    %s241 = scalar_lea.vmem [#allocation5], 64
    %v242 = vld [vmem:[%s241] sm:$0xf]
    %v243 = vld [vmem:[%s241 + $0x4] sm:$0xf]
    %v244 = vld [vmem:[%s241 + $0x8] sm:$0xf]
    %v245 = vld [vmem:[%s241 + $0xc] sm:$0xf]
    %v246 = vld [vmem:[%s241 + $0x10] sm:$0xf]
    %v247 = vld [vmem:[%s241 + $0x14] sm:$0xf]
    %v248 = vld [vmem:[%s241 + $0x18] sm:$0xf]
    %v249 = vld [vmem:[%s241 + $0x1c] sm:$0xf]
    %v258 = vunpack.c.l.b16 %v242
    %v259 = vunpack.c.l.b16 %v243
    %v260 = vunpack.c.l.b16 %v244
    %v261 = vunpack.c.l.b16 %v245
    %v262 = vunpack.c.l.b16 %v246
    %v263 = vunpack.c.l.b16 %v247
    %v264 = vunpack.c.l.b16 %v248
    %v265 = vunpack.c.l.b16 %v249
    %v266 = vpack.c.b16 %v259, %v258
    %v267 = vpack.c.b16 %v261, %v260
    %v268 = vpack.c.b16 %v263, %v262
    %v269 = vpack.c.b16 %v265, %v264
    %274 = vmatprep.subr.bf16.mxu0 0
    %275 = vmatpush1.bf16.msra.mxu0 0
    %276 = vmatprep.subr.bf16.mxu0 0
    %277 = vmatpush1.bf16.msra.mxu0 0
    %278 = vmatprep.subr.bf16.mxu0 0
    %279 = vmatpush1.bf16.msra.mxu0 0
    %280 = vmatprep.subr.bf16.mxu0 0
    %281 = vmatpush1.bf16.msra.mxu0 0
    %282 = vmatprep.subr.bf16.mxu0 0
    %283 = vmatpush1.bf16.msra.mxu0 %v269
    %284 = vmatprep.subr.bf16.mxu0 0
    %285 = vmatpush1.bf16.msra.mxu0 %v268
    %286 = vmatprep.subr.bf16.mxu0 0
    %287 = vmatpush1.bf16.msra.mxu0 %v267
    %288 = vmatprep.subr.bf16.mxu0 0
    %289 = vmatpush1.bf16.msra.mxu0 %v266
    %290 = vmatprep.subr.bf16.mxu0 0
    %291 = vmatpush2.bf16.msra.mxu0 0
    %292 = vmatprep.subr.bf16.mxu0 0
    %293 = vmatpush2.bf16.msra.mxu0 0
    %294 = vmatprep.subr.bf16.mxu0 0
    %295 = vmatpush2.bf16.msra.mxu0 0
    %296 = vmatprep.subr.bf16.mxu0 0
    %297 = vmatpush2.bf16.msra.mxu0 0
    %298 = vmatprep.subr.bf16.mxu0 0
    %299 = vmatpush2.bf16.msra.mxu0 0
    %300 = vmatprep.subr.bf16.mxu0 0
    %301 = vmatpush2.bf16.msra.mxu0 0
    %302 = vmatprep.subr.bf16.mxu0 0
    %303 = vmatpush2.bf16.msra.mxu0 0
    %304 = vmatprep.subr.bf16.mxu0 0
    %305 = vmatpush2.bf16.msra.mxu0 0
    %306 = vmatprep.mubr.bf16.mxu0 0
    %307 = vmatmul.mubr.bf16.gmra.mxu0 %v178
    %v308 = vpop.f32.mrf.mxu0
    %v309 = vadd.f32 0.0, %v308
    %v310 = vpop.f32.mrf.mxu0
    %v311 = vpop.f32.mrf.mxu0
    %v312 = vadd.f32 0.0, %v311
    %v313 = vpop.f32.mrf.mxu0
    %314 = vmatprep.mubr.bf16.mxu0 0
    %315 = vmatmul.mubr.bf16.gmra.mxu0 %v181
    %v316 = vpop.f32.mrf.mxu0
    %v317 = vadd.f32 0.0, %v316
    %v318 = vpop.f32.mrf.mxu0
    %v319 = vpop.f32.mrf.mxu0
    %v320 = vadd.f32 0.0, %v319
    %v321 = vpop.f32.mrf.mxu0
    %322 = vdwg.mxu0
    %v323 = vrot.slane %v218, 7
    %v324 = vrot.slane %v221, 7
    %v325 = vrot.slane %v226, 7
    %v326 = vrot.slane %v229, 7
    %vm327 = vcmp.lt.s32.totalorder %v70, 1
    %v328 = vsel %vm327, %v325, %v326
    %v329 = vsel %vm327, %v324, %v325
    %v330 = vsel %vm327, %v323, %v324
    %v331 = vsel %vm327, %v326, %v323
    %v332 = vsel %vm122, 0.0, %v331
    %v333 = vsel %vm123, 0.0, %v330
    %v334 = vsel %vm124, 0.0, %v329
    %v335 = vsel %vm125, 0.0, %v328
    %v344 = vunpack.c.l.b16 %v233
    %v345 = vunpack.c.l.b16 %v234
    %v346 = vunpack.c.l.b16 %v235
    %v347 = vunpack.c.l.b16 %v236
    %v348 = vunpack.c.l.b16 %v237
    %v349 = vunpack.c.l.b16 %v238
    %v350 = vunpack.c.l.b16 %v239
    %v351 = vunpack.c.l.b16 %v240
    %v352 = vpack.c.b16 %v345, %v344
    %v353 = vpack.c.b16 %v347, %v346
    %v354 = vpack.c.b16 %v349, %v348
    %v355 = vpack.c.b16 %v351, %v350
    %360 = vmatprep.subr.bf16.mxu0 0
    %361 = vmatpush1.bf16.msra.mxu0 0
    %362 = vmatprep.subr.bf16.mxu0 0
    %363 = vmatpush1.bf16.msra.mxu0 0
    %364 = vmatprep.subr.bf16.mxu0 0
    %365 = vmatpush1.bf16.msra.mxu0 0
    %366 = vmatprep.subr.bf16.mxu0 0
    %367 = vmatpush1.bf16.msra.mxu0 0
    %368 = vmatprep.subr.bf16.mxu0 0
    %369 = vmatpush1.bf16.msra.mxu0 %v355
    %370 = vmatprep.subr.bf16.mxu0 0
    %371 = vmatpush1.bf16.msra.mxu0 %v354
    %372 = vmatprep.subr.bf16.mxu0 0
    %373 = vmatpush1.bf16.msra.mxu0 %v353
    %374 = vmatprep.subr.bf16.mxu0 0
    %375 = vmatpush1.bf16.msra.mxu0 %v352
    %376 = vmatprep.subr.bf16.mxu0 0
    %377 = vmatpush2.bf16.msra.mxu0 0
    %378 = vmatprep.subr.bf16.mxu0 0
    %379 = vmatpush2.bf16.msra.mxu0 0
    %380 = vmatprep.subr.bf16.mxu0 0
    %381 = vmatpush2.bf16.msra.mxu0 0
    %382 = vmatprep.subr.bf16.mxu0 0
    %383 = vmatpush2.bf16.msra.mxu0 0
    %384 = vmatprep.subr.bf16.mxu0 0
    %385 = vmatpush2.bf16.msra.mxu0 0
    %386 = vmatprep.subr.bf16.mxu0 0
    %387 = vmatpush2.bf16.msra.mxu0 0
    %388 = vmatprep.subr.bf16.mxu0 0
    %389 = vmatpush2.bf16.msra.mxu0 0
    %390 = vmatprep.subr.bf16.mxu0 0
    %391 = vmatpush2.bf16.msra.mxu0 0
    %392 = vmatprep.mubr.bf16.mxu0 0
    %393 = vmatmul.mubr.bf16.gmra.mxu0 %v178
    %v394 = vpop.f32.mrf.mxu0
    %v395 = vadd.f32 %v332, %v394
    %v396 = vpop.f32.mrf.mxu0
    %v397 = vpop.f32.mrf.mxu0
    %v398 = vadd.f32 %v333, %v397
    %v399 = vpop.f32.mrf.mxu0
    %400 = vmatprep.mubr.bf16.mxu0 0
    %401 = vmatmul.mubr.bf16.gmra.mxu0 %v181
    %v402 = vpop.f32.mrf.mxu0
    %v403 = vadd.f32 %v334, %v402
    %v404 = vpop.f32.mrf.mxu0
    %v405 = vpop.f32.mrf.mxu0
    %v406 = vadd.f32 %v335, %v405
    %v407 = vpop.f32.mrf.mxu0
    %408 = vdwg.mxu0
    %v409 = vrot.slane %v309, 1
    %v410 = vrot.slane %v312, 1
    %v411 = vrot.slane %v317, 1
    %v412 = vrot.slane %v320, 1
    %vm413 = vcmp.lt.s32.totalorder %v70, 7
    %v414 = vsel %vm413, %v411, %v412
    %v415 = vsel %vm413, %v410, %v411
    %v416 = vsel %vm413, %v409, %v410
    %v417 = vsel %vm413, %v412, %v409
    %v418 = vsel %vm126, 0.0, %v416
    %v419 = vsel %vm127, 0.0, %v415
    %v420 = vsel %vm128, 0.0, %v414
    %v421 = vsel %vm129, 0.0, %v417
    %v422 = vadd.f32 %v395, %v418
    %v423 = vadd.f32 %v398, %v419
    %v424 = vadd.f32 %v403, %v420
    %v425 = vadd.f32 %v406, %v421
    %v426 = vld [vmem:[%s2] sm:$0x1]
    %v428 = vlaneseq
    %v429 = vshrl.u32 %v428, 7
    %v430 = vsub.s32 0, %v429
    %v431 = vrot.slane %v426, %v430
    %v433 = vmul.f32 %v422, %v431
    %v434 = vmul.f32 %v423, %v431
    %v435 = vmul.f32 %v424, %v431
    %v436 = vmul.f32 %v425, %v431
    %v437 = vld [vmem:[%s3] sm:$0x1]
    %v439 = vlaneseq
    %v440 = vshrl.u32 %v439, 7
    %v441 = vsub.s32 0, %v440
    %v442 = vrot.slane %v437, %v441
    %v444 = vadd.f32 %v433, %v442
    %v445 = vadd.f32 %v434, %v442
    %v446 = vadd.f32 %v435, %v442
    %v447 = vadd.f32 %v436, %v442
    %v448 = vmax.f32 %v444, 0.0
    %v449 = vmax.f32 %v445, 0.0
    %v450 = vmax.f32 %v446, 0.0
    %v451 = vmax.f32 %v447, 0.0
    %v452 = vpack.c.bf16 %v449, %v448
    %v453 = vpack.c.bf16 %v451, %v450
    %v454 = vld [vmem:[#allocation7] sm:$0xf]
    %v455 = vld [vmem:[#allocation7 + $0x4] sm:$0xf]
    %v456 = vld [vmem:[#allocation7 + $0x8] sm:$0xf]
    %v457 = vld [vmem:[#allocation7 + $0xc] sm:$0xf]
    %v458 = vld [vmem:[#allocation7 + $0x10] sm:$0xf]
    %v459 = vld [vmem:[#allocation7 + $0x14] sm:$0xf]
    %v460 = vld [vmem:[#allocation7 + $0x18] sm:$0xf]
    %v461 = vld [vmem:[#allocation7 + $0x1c] sm:$0xf]
    %v462 = vld [vmem:[#allocation7 + $0x20] sm:$0xf]
    %v463 = vld [vmem:[#allocation7 + $0x24] sm:$0xf]
    %v464 = vld [vmem:[#allocation7 + $0x28] sm:$0xf]
    %v465 = vld [vmem:[#allocation7 + $0x2c] sm:$0xf]
    %v466 = vld [vmem:[#allocation7 + $0x30] sm:$0xf]
    %v467 = vld [vmem:[#allocation7 + $0x34] sm:$0xf]
    %v468 = vld [vmem:[#allocation7 + $0x38] sm:$0xf]
    %v469 = vld [vmem:[#allocation7 + $0x3c] sm:$0xf]
    %v486 = vunpack.c.l.b16 %v454
    %v487 = vunpack.c.l.b16 %v455
    %v488 = vunpack.c.l.b16 %v456
    %v489 = vunpack.c.l.b16 %v457
    %v490 = vunpack.c.l.b16 %v458
    %v491 = vunpack.c.l.b16 %v459
    %v492 = vunpack.c.l.b16 %v460
    %v493 = vunpack.c.l.b16 %v461
    %v494 = vunpack.c.l.b16 %v462
    %v495 = vunpack.c.l.b16 %v463
    %v496 = vunpack.c.l.b16 %v464
    %v497 = vunpack.c.l.b16 %v465
    %v498 = vunpack.c.l.b16 %v466
    %v499 = vunpack.c.l.b16 %v467
    %v500 = vunpack.c.l.b16 %v468
    %v501 = vunpack.c.l.b16 %v469
    %v502 = vpack.c.b16 %v487, %v486
    %v503 = vpack.c.b16 %v489, %v488
    %v504 = vpack.c.b16 %v491, %v490
    %v505 = vpack.c.b16 %v493, %v492
    %v506 = vpack.c.b16 %v495, %v494
    %v507 = vpack.c.b16 %v497, %v496
    %v508 = vpack.c.b16 %v499, %v498
    %v509 = vpack.c.b16 %v501, %v500
    %518 = vmatprep.subr.bf16.mxu0 0
    %519 = vmatpush1.bf16.msra.mxu0 %v509
    %520 = vmatprep.subr.bf16.mxu0 0
    %521 = vmatpush1.bf16.msra.mxu0 %v508
    %522 = vmatprep.subr.bf16.mxu0 0
    %523 = vmatpush1.bf16.msra.mxu0 %v507
    %524 = vmatprep.subr.bf16.mxu0 0
    %525 = vmatpush1.bf16.msra.mxu0 %v506
    %526 = vmatprep.subr.bf16.mxu0 0
    %527 = vmatpush1.bf16.msra.mxu0 %v505
    %528 = vmatprep.subr.bf16.mxu0 0
    %529 = vmatpush1.bf16.msra.mxu0 %v504
    %530 = vmatprep.subr.bf16.mxu0 0
    %531 = vmatpush1.bf16.msra.mxu0 %v503
    %532 = vmatprep.subr.bf16.mxu0 0
    %533 = vmatpush1.bf16.msra.mxu0 %v502
    %534 = vmatprep.subr.bf16.mxu0 0
    %535 = vmatpush2.bf16.msra.mxu0 0
    %536 = vmatprep.subr.bf16.mxu0 0
    %537 = vmatpush2.bf16.msra.mxu0 0
    %538 = vmatprep.subr.bf16.mxu0 0
    %539 = vmatpush2.bf16.msra.mxu0 0
    %540 = vmatprep.subr.bf16.mxu0 0
    %541 = vmatpush2.bf16.msra.mxu0 0
    %542 = vmatprep.subr.bf16.mxu0 0
    %543 = vmatpush2.bf16.msra.mxu0 0
    %544 = vmatprep.subr.bf16.mxu0 0
    %545 = vmatpush2.bf16.msra.mxu0 0
    %546 = vmatprep.subr.bf16.mxu0 0
    %547 = vmatpush2.bf16.msra.mxu0 0
    %548 = vmatprep.subr.bf16.mxu0 0
    %549 = vmatpush2.bf16.msra.mxu0 0
    %550 = vmatprep.mubr.bf16.mxu0 0
    %551 = vmatmul.mubr.bf16.gmra.mxu0 %v452
    %v552 = vpop.f32.mrf.mxu0
    %v553 = vadd.f32 0.0, %v552
    %v554 = vpop.f32.mrf.mxu0
    %v555 = vpop.f32.mrf.mxu0
    %v556 = vadd.f32 0.0, %v555
    %v557 = vpop.f32.mrf.mxu0
    %558 = vmatprep.mubr.bf16.mxu0 0
    %559 = vmatmul.mubr.bf16.gmra.mxu0 %v453
    %v560 = vpop.f32.mrf.mxu0
    %v561 = vadd.f32 0.0, %v560
    %v562 = vpop.f32.mrf.mxu0
    %v563 = vpop.f32.mrf.mxu0
    %v564 = vadd.f32 0.0, %v563
    %v565 = vpop.f32.mrf.mxu0
    %566 = vdwg.mxu0
    %s567 = scalar_lea.vmem [#allocation7], 64
    %v568 = vld [vmem:[%s567] sm:$0xf]
    %v569 = vld [vmem:[%s567 + $0x4] sm:$0xf]
    %v570 = vld [vmem:[%s567 + $0x8] sm:$0xf]
    %v571 = vld [vmem:[%s567 + $0xc] sm:$0xf]
    %v572 = vld [vmem:[%s567 + $0x10] sm:$0xf]
    %v573 = vld [vmem:[%s567 + $0x14] sm:$0xf]
    %v574 = vld [vmem:[%s567 + $0x18] sm:$0xf]
    %v575 = vld [vmem:[%s567 + $0x1c] sm:$0xf]
    %v576 = vld [vmem:[%s567 + $0x20] sm:$0xf]
    %v577 = vld [vmem:[%s567 + $0x24] sm:$0xf]
    %v578 = vld [vmem:[%s567 + $0x28] sm:$0xf]
    %v579 = vld [vmem:[%s567 + $0x2c] sm:$0xf]
    %v580 = vld [vmem:[%s567 + $0x30] sm:$0xf]
    %v581 = vld [vmem:[%s567 + $0x34] sm:$0xf]
    %v582 = vld [vmem:[%s567 + $0x38] sm:$0xf]
    %v583 = vld [vmem:[%s567 + $0x3c] sm:$0xf]
    %s584 = scalar_lea.vmem [#allocation7], 128
    %v585 = vld [vmem:[%s584] sm:$0xf]
    %v586 = vld [vmem:[%s584 + $0x4] sm:$0xf]
    %v587 = vld [vmem:[%s584 + $0x8] sm:$0xf]
    %v588 = vld [vmem:[%s584 + $0xc] sm:$0xf]
    %v589 = vld [vmem:[%s584 + $0x10] sm:$0xf]
    %v590 = vld [vmem:[%s584 + $0x14] sm:$0xf]
    %v591 = vld [vmem:[%s584 + $0x18] sm:$0xf]
    %v592 = vld [vmem:[%s584 + $0x1c] sm:$0xf]
    %v593 = vld [vmem:[%s584 + $0x20] sm:$0xf]
    %v594 = vld [vmem:[%s584 + $0x24] sm:$0xf]
    %v595 = vld [vmem:[%s584 + $0x28] sm:$0xf]
    %v596 = vld [vmem:[%s584 + $0x2c] sm:$0xf]
    %v597 = vld [vmem:[%s584 + $0x30] sm:$0xf]
    %v598 = vld [vmem:[%s584 + $0x34] sm:$0xf]
    %v599 = vld [vmem:[%s584 + $0x38] sm:$0xf]
    %v600 = vld [vmem:[%s584 + $0x3c] sm:$0xf]
    %v617 = vunpack.c.l.b16 %v585
    %v618 = vunpack.c.l.b16 %v586
    %v619 = vunpack.c.l.b16 %v587
    %v620 = vunpack.c.l.b16 %v588
    %v621 = vunpack.c.l.b16 %v589
    %v622 = vunpack.c.l.b16 %v590
    %v623 = vunpack.c.l.b16 %v591
    %v624 = vunpack.c.l.b16 %v592
    %v625 = vunpack.c.l.b16 %v593
    %v626 = vunpack.c.l.b16 %v594
    %v627 = vunpack.c.l.b16 %v595
    %v628 = vunpack.c.l.b16 %v596
    %v629 = vunpack.c.l.b16 %v597
    %v630 = vunpack.c.l.b16 %v598
    %v631 = vunpack.c.l.b16 %v599
    %v632 = vunpack.c.l.b16 %v600
    %v633 = vpack.c.b16 %v618, %v617
    %v634 = vpack.c.b16 %v620, %v619
    %v635 = vpack.c.b16 %v622, %v621
    %v636 = vpack.c.b16 %v624, %v623
    %v637 = vpack.c.b16 %v626, %v625
    %v638 = vpack.c.b16 %v628, %v627
    %v639 = vpack.c.b16 %v630, %v629
    %v640 = vpack.c.b16 %v632, %v631
    %649 = vmatprep.subr.bf16.mxu0 0
    %650 = vmatpush1.bf16.msra.mxu0 %v640
    %651 = vmatprep.subr.bf16.mxu0 0
    %652 = vmatpush1.bf16.msra.mxu0 %v639
    %653 = vmatprep.subr.bf16.mxu0 0
    %654 = vmatpush1.bf16.msra.mxu0 %v638
    %655 = vmatprep.subr.bf16.mxu0 0
    %656 = vmatpush1.bf16.msra.mxu0 %v637
    %657 = vmatprep.subr.bf16.mxu0 0
    %658 = vmatpush1.bf16.msra.mxu0 %v636
    %659 = vmatprep.subr.bf16.mxu0 0
    %660 = vmatpush1.bf16.msra.mxu0 %v635
    %661 = vmatprep.subr.bf16.mxu0 0
    %662 = vmatpush1.bf16.msra.mxu0 %v634
    %663 = vmatprep.subr.bf16.mxu0 0
    %664 = vmatpush1.bf16.msra.mxu0 %v633
    %665 = vmatprep.subr.bf16.mxu0 0
    %666 = vmatpush2.bf16.msra.mxu0 0
    %667 = vmatprep.subr.bf16.mxu0 0
    %668 = vmatpush2.bf16.msra.mxu0 0
    %669 = vmatprep.subr.bf16.mxu0 0
    %670 = vmatpush2.bf16.msra.mxu0 0
    %671 = vmatprep.subr.bf16.mxu0 0
    %672 = vmatpush2.bf16.msra.mxu0 0
    %673 = vmatprep.subr.bf16.mxu0 0
    %674 = vmatpush2.bf16.msra.mxu0 0
    %675 = vmatprep.subr.bf16.mxu0 0
    %676 = vmatpush2.bf16.msra.mxu0 0
    %677 = vmatprep.subr.bf16.mxu0 0
    %678 = vmatpush2.bf16.msra.mxu0 0
    %679 = vmatprep.subr.bf16.mxu0 0
    %680 = vmatpush2.bf16.msra.mxu0 0
    %681 = vmatprep.mubr.bf16.mxu0 0
    %682 = vmatmul.mubr.bf16.gmra.mxu0 %v452
    %v683 = vpop.f32.mrf.mxu0
    %v684 = vadd.f32 0.0, %v683
    %v685 = vpop.f32.mrf.mxu0
    %v686 = vpop.f32.mrf.mxu0
    %v687 = vadd.f32 0.0, %v686
    %v688 = vpop.f32.mrf.mxu0
    %689 = vmatprep.mubr.bf16.mxu0 0
    %690 = vmatmul.mubr.bf16.gmra.mxu0 %v453
    %v691 = vpop.f32.mrf.mxu0
    %v692 = vadd.f32 0.0, %v691
    %v693 = vpop.f32.mrf.mxu0
    %v694 = vpop.f32.mrf.mxu0
    %v695 = vadd.f32 0.0, %v694
    %v696 = vpop.f32.mrf.mxu0
    %697 = vdwg.mxu0
    %v698 = vrot.slane %v553, 7
    %v699 = vrot.slane %v556, 7
    %v700 = vrot.slane %v561, 7
    %v701 = vrot.slane %v564, 7
    %v702 = vsel %vm327, %v700, %v701
    %v703 = vsel %vm327, %v699, %v700
    %v704 = vsel %vm327, %v698, %v699
    %v705 = vsel %vm327, %v701, %v698
    %v706 = vsel %vm122, 0.0, %v705
    %v707 = vsel %vm123, 0.0, %v704
    %v708 = vsel %vm124, 0.0, %v703
    %v709 = vsel %vm125, 0.0, %v702
    %v726 = vunpack.c.l.b16 %v568
    %v727 = vunpack.c.l.b16 %v569
    %v728 = vunpack.c.l.b16 %v570
    %v729 = vunpack.c.l.b16 %v571
    %v730 = vunpack.c.l.b16 %v572
    %v731 = vunpack.c.l.b16 %v573
    %v732 = vunpack.c.l.b16 %v574
    %v733 = vunpack.c.l.b16 %v575
    %v734 = vunpack.c.l.b16 %v576
    %v735 = vunpack.c.l.b16 %v577
    %v736 = vunpack.c.l.b16 %v578
    %v737 = vunpack.c.l.b16 %v579
    %v738 = vunpack.c.l.b16 %v580
    %v739 = vunpack.c.l.b16 %v581
    %v740 = vunpack.c.l.b16 %v582
    %v741 = vunpack.c.l.b16 %v583
    %v742 = vpack.c.b16 %v727, %v726
    %v743 = vpack.c.b16 %v729, %v728
    %v744 = vpack.c.b16 %v731, %v730
    %v745 = vpack.c.b16 %v733, %v732
    %v746 = vpack.c.b16 %v735, %v734
    %v747 = vpack.c.b16 %v737, %v736
    %v748 = vpack.c.b16 %v739, %v738
    %v749 = vpack.c.b16 %v741, %v740
    %758 = vmatprep.subr.bf16.mxu0 0
    %759 = vmatpush1.bf16.msra.mxu0 %v749
    %760 = vmatprep.subr.bf16.mxu0 0
    %761 = vmatpush1.bf16.msra.mxu0 %v748
    %762 = vmatprep.subr.bf16.mxu0 0
    %763 = vmatpush1.bf16.msra.mxu0 %v747
    %764 = vmatprep.subr.bf16.mxu0 0
    %765 = vmatpush1.bf16.msra.mxu0 %v746
    %766 = vmatprep.subr.bf16.mxu0 0
    %767 = vmatpush1.bf16.msra.mxu0 %v745
    %768 = vmatprep.subr.bf16.mxu0 0
    %769 = vmatpush1.bf16.msra.mxu0 %v744
    %770 = vmatprep.subr.bf16.mxu0 0
    %771 = vmatpush1.bf16.msra.mxu0 %v743
    %772 = vmatprep.subr.bf16.mxu0 0
    %773 = vmatpush1.bf16.msra.mxu0 %v742
    %774 = vmatprep.subr.bf16.mxu0 0
    %775 = vmatpush2.bf16.msra.mxu0 0
    %776 = vmatprep.subr.bf16.mxu0 0
    %777 = vmatpush2.bf16.msra.mxu0 0
    %778 = vmatprep.subr.bf16.mxu0 0
    %779 = vmatpush2.bf16.msra.mxu0 0
    %780 = vmatprep.subr.bf16.mxu0 0
    %781 = vmatpush2.bf16.msra.mxu0 0
    %782 = vmatprep.subr.bf16.mxu0 0
    %783 = vmatpush2.bf16.msra.mxu0 0
    %784 = vmatprep.subr.bf16.mxu0 0
    %785 = vmatpush2.bf16.msra.mxu0 0
    %786 = vmatprep.subr.bf16.mxu0 0
    %787 = vmatpush2.bf16.msra.mxu0 0
    %788 = vmatprep.subr.bf16.mxu0 0
    %789 = vmatpush2.bf16.msra.mxu0 0
    %790 = vmatprep.mubr.bf16.mxu0 0
    %791 = vmatmul.mubr.bf16.gmra.mxu0 %v452
    %v792 = vpop.f32.mrf.mxu0
    %v793 = vadd.f32 %v706, %v792
    %v794 = vpop.f32.mrf.mxu0
    %v795 = vpop.f32.mrf.mxu0
    %v796 = vadd.f32 %v707, %v795
    %v797 = vpop.f32.mrf.mxu0
    %798 = vmatprep.mubr.bf16.mxu0 0
    %799 = vmatmul.mubr.bf16.gmra.mxu0 %v453
    %v800 = vpop.f32.mrf.mxu0
    %v801 = vadd.f32 %v708, %v800
    %v802 = vpop.f32.mrf.mxu0
    %v803 = vpop.f32.mrf.mxu0
    %v804 = vadd.f32 %v709, %v803
    %v805 = vpop.f32.mrf.mxu0
    %806 = vdwg.mxu0
    %v807 = vrot.slane %v684, 1
    %v808 = vrot.slane %v687, 1
    %v809 = vrot.slane %v692, 1
    %v810 = vrot.slane %v695, 1
    %v811 = vsel %vm413, %v809, %v810
    %v812 = vsel %vm413, %v808, %v809
    %v813 = vsel %vm413, %v807, %v808
    %v814 = vsel %vm413, %v810, %v807
    %v815 = vsel %vm126, 0.0, %v813
    %v816 = vsel %vm127, 0.0, %v812
    %v817 = vsel %vm128, 0.0, %v811
    %v818 = vsel %vm129, 0.0, %v814
    %v819 = vadd.f32 %v793, %v815
    %v820 = vadd.f32 %v796, %v816
    %v821 = vadd.f32 %v801, %v817
    %v822 = vadd.f32 %v804, %v818
    %v823 = vld [vmem:[%s5] sm:$0x1]
    %v825 = vlaneseq
    %v826 = vshrl.u32 %v825, 7
    %v827 = vsub.s32 0, %v826
    %v828 = vrot.slane %v823, %v827
    %v830 = vmul.f32 %v819, %v828
    %v831 = vmul.f32 %v820, %v828
    %v832 = vmul.f32 %v821, %v828
    %v833 = vmul.f32 %v822, %v828
    %v834 = vld [vmem:[%s6] sm:$0x1]
    %v836 = vlaneseq
    %v837 = vshrl.u32 %v836, 7
    %v838 = vsub.s32 0, %v837
    %v839 = vrot.slane %v834, %v838
    %v841 = vadd.f32 %v830, %v839
    %v842 = vadd.f32 %v831, %v839
    %v843 = vadd.f32 %v832, %v839
    %v844 = vadd.f32 %v833, %v839
    %v845 = vmax.f32 %v841, 0.0
    %v846 = vmax.f32 %v842, 0.0
    %v847 = vmax.f32 %v843, 0.0
    %v848 = vmax.f32 %v844, 0.0
    %849 = vst [vmem:[#allocation8] sm:$0xff] %v845
    %850 = vst [vmem:[#allocation8 + $0x8] sm:$0xff] %v846
    %851 = vst [vmem:[#allocation8 + $0x10] sm:$0xff] %v847
    %852 = vst [vmem:[#allocation8 + $0x18] sm:$0xff] %v848
    // Predicated region
    $region42: #{tpu_custom_call.1} parent=1 // pred_check
      _
    $region43: #{tpu_custom_call.1} parent=1 // pred_check_branch
      %854 = sbr.rel (0) target = $region45
    $region44: #{tpu_custom_call.1} parent=1 // pred_region
      %s856 = ssub.s32 512, 512
      %857 = vsyncadd [#allocation4], %s856
      %s858 = sshll.u32 [#allocation8], 4
      %s859 = int_to_ptr.vmem [resolvable:$true] %s858
      %864 = dma.vmem_to_hbm [thread:$0]  %s859, 512, %s7, [#allocation4], 128, 128, 8
    $region45: #{tpu_custom_call.1} parent=1 // pred_fallthru
      _
    // Predicated region
    $region46: #{tpu_custom_call.1} parent=1 // pred_check
      _
    $region47: #{tpu_custom_call.1} parent=1 // pred_check_branch
      %866 = sbr.rel (0) target = $region49
    $region48: #{tpu_custom_call.1} parent=1 // pred_region
      %867 = dma.done [#allocation4], 512
    $region49: #{tpu_custom_call.1} parent=1 // pred_fallthru
      _
    %868 = vsyncpa [#allocation3], 1
    %869 = vsyncpa [#allocation6], 1
    %870 = vsyncpa [#allocation4], 1

</llo_original>
